<compile_context>
chip_gen: v5e
topology: v5e:2x2
jax: 0.10.0
libtpu: 0.0.40
codegen_flags: <defaults>
</compile_context>

<pallas_src>
import functools

import jax
import jax.numpy as jnp
from jax.experimental import pallas as pl
from jax.experimental.pallas import tpu as pltpu

LANES = 128                 # vreg lane width; lane-partial accumulator width
N_ACCS = 4                  # interleaved accumulators (ILP across VALU slots)
QUANTUM = N_ACCS * LANES    # feature-tile widths are multiples of this (512)


def _accumulate(x_ref, t_ref, o_ref, base, n_valid, masked):
    """Adds this tile's lane-partial SSE into o_ref.

    Streams the (batch, tn) tile 128 lanes at a time directly from the refs
    (no full-tile f32 temporaries), upcasts per chunk, and accumulates into
    N_ACCS independent (batch, 128) accumulators. `masked` (static) zeroes
    columns whose global feature index is >= n_valid (ragged last tile and
    clamped duplicate tiles past the end of the feature range).
    """
    batch, tn = x_ref.shape
    groups = tn // QUANTUM  # static; tn is always a multiple of QUANTUM

    if masked:
        lane_ids = jax.lax.broadcasted_iota(jnp.int32, (batch, LANES), 1)

    def body(g, accs):
        new = []
        for a in range(N_ACCS):
            c = g * N_ACCS + a
            start = pl.multiple_of(c * LANES, LANES)
            xs = x_ref[:, pl.ds(start, LANES)].astype(jnp.float32)
            ts = t_ref[:, pl.ds(start, LANES)].astype(jnp.float32)
            d = xs - ts
            sq = d * d
            if masked:
                col = base + c * LANES + lane_ids
                sq = jnp.where(col < n_valid, sq, 0.0)
            new.append(accs[a] + sq)
        return tuple(new)

    init = tuple(jnp.zeros((batch, LANES), jnp.float32) for _ in range(N_ACCS))
    accs = jax.lax.fori_loop(0, groups, body, init, unroll=2)

    total = accs[0]
    for a in range(1, N_ACCS):
        total = total + accs[a]
    o_ref[...] += total


def ohem_sse_kernel(x_ref, t_ref, o_ref, *, n_valid, tiles_per_split):
    """Per-sample SSE, lane-partial, streaming.

    Grid: (nsplit [parallel], tiles_per_split [arbitrary / reduction]).
    x_ref, t_ref: (batch, tn) feature tiles (original dtype, upcast in-kernel).
    o_ref:        (batch, LANES) f32 lane-partial accumulator, resident across
                  the inner grid axis; one per split.
    """
    p = pl.program_id(0)
    j = pl.program_id(1)

    @pl.when(j == 0)
    def _():
        o_ref[...] = jnp.zeros_like(o_ref)

    tn = x_ref.shape[1]
    tile_idx = p * tiles_per_split + j     # logical (unclamped) tile id
    base = tile_idx * tn                   # global column of this tile's start

    # Only the ragged last tile (and clamped duplicate tiles past the end of
    # the feature range) need masking; full tiles take the cheap unmasked path.
    is_tail = base + tn > n_valid

    @pl.when(jnp.logical_not(is_tail))
    def _():
        _accumulate(x_ref, t_ref, o_ref, base, n_valid, masked=False)

    @pl.when(is_tail)
    def _():
        _accumulate(x_ref, t_ref, o_ref, base, n_valid, masked=True)


def ohem_forward(x, target, top_k=0.7, vmem_budget_bytes=24 << 20, nsplit=2):
    """Equivalent of OHEM(top_k).forward(x, target). Returns a scalar."""
    batch = x.shape[0]
    xf = x.reshape(batch, -1)
    tf = target.reshape(batch, -1)
    n = xf.shape[1]
    k = int(top_k * batch)  # matches PyTorch's int() truncation
    assert k >= 1, "top_k * batch must be >= 1"

    isum = xf.dtype.itemsize + tf.dtype.itemsize

    # Largest QUANTUM-aligned feature-tile width whose double-buffered input
    # pipeline fits the budget: 2 buffers x batch x tn x (isz_x + isz_t).
    # The kernel streams chunks straight from the refs, so there are no
    # full-tile f32 temporaries to account for.
    max_tn = (vmem_budget_bytes // (2 * batch * isum)) // QUANTUM * QUANTUM
    n_aligned = pl.cdiv(n, QUANTUM) * QUANTUM
    tn = min(max(max_tn, QUANTUM), n_aligned)

    num_tiles = pl.cdiv(n, tn)               # no wrapper-side padding
    tiles_per_split = pl.cdiv(num_tiles, nsplit)
    grid = (nsplit, tiles_per_split)

    # Scoped-VMEM limit sized from actual usage (+ headroom), capped at the
    # v6e/v7x scoped default (32 MiB); explicit so v5e's 16 MiB default never
    # binds when larger tiles are picked.
    input_buf_bytes = 2 * batch * tn * isum
    vmem_limit = int(min(max(input_buf_bytes + (4 << 20), 16 << 20), 32 << 20))

    kernel = functools.partial(
        ohem_sse_kernel, n_valid=n, tiles_per_split=tiles_per_split)

    def feat_map(p, j):
        # Clamp so an out-of-range trailing tile of the last split re-reads the
        # final valid tile; its contribution is masked to zero in-kernel
        # (its logical base column is >= n_valid).
        return (0, jnp.minimum(p * tiles_per_split + j, num_tiles - 1))

    sse_partial = pl.pallas_call(
        kernel,
        out_shape=jax.ShapeDtypeStruct((nsplit, batch, LANES), jnp.float32),
        grid_spec=pltpu.PrefetchScalarGridSpec(
            num_scalar_prefetch=0,
            grid=grid,
            in_specs=[
                pl.BlockSpec((batch, tn), feat_map),
                pl.BlockSpec((batch, tn), feat_map),
            ],
            out_specs=pl.BlockSpec((None, batch, LANES), lambda p, j: (p, 0, 0)),
        ),
        compiler_params=pltpu.CompilerParams(
            # Outer axis: independent feature halves (sharded across the two
            # TensorCores on v7x; harmless on single-TC v5e/v6e). Inner axis:
            # carried reduction into the resident accumulator.
            dimension_semantics=("parallel", "arbitrary"),
            vmem_limit_bytes=vmem_limit,
        ),
    )(xf, tf)

    # Final cross-lane/split reduce + mean + top-k over the (tiny) batch in XLA.
    per_sample = jnp.sum(sse_partial, axis=(0, 2)) / float(n)
    vals = jax.lax.top_k(per_sample, k)[0]
    return jnp.mean(vals)


def ohem_reference(x, target, top_k=0.7):
    batch = x.shape[0]
    xf = x.reshape(batch, -1).astype(jnp.float32)
    tf = target.reshape(batch, -1).astype(jnp.float32)
    loss = jnp.mean((xf - tf) ** 2, axis=1)
    k = int(top_k * batch)
    vals = jax.lax.top_k(loss, k)[0]
    return jnp.mean(vals)


if __name__ == "__main__":
    key = jax.random.PRNGKey(0)
    k1, k2, k3, k4 = jax.random.split(key, 4)

    # Small NCHW shapes: batch=8, channels=4, spatial=16x16 -> n = 1024.
    B, C, H, W = 8, 4, 16, 16
    x = jax.random.normal(k1, (B, C, H, W), dtype=jnp.float32)
    t = jax.random.normal(k2, (B, C, H, W), dtype=jnp.float32)

    out = jax.block_until_ready(ohem_forward(x, t, top_k=0.7))
    ref = jax.block_until_ready(ohem_reference(x, t, top_k=0.7))
    assert jnp.allclose(out, ref, rtol=1e-5, atol=1e-5), (out, ref)

    # Ragged feature count (n = 960, not a multiple of the 128-lane chunk):
    # exercises the in-kernel tail-masking path (no wrapper-side padding).
    B2, C2, H2, W2 = 8, 4, 15, 16
    x2 = jax.random.normal(k3, (B2, C2, H2, W2), dtype=jnp.float32)
    t2 = jax.random.normal(k4, (B2, C2, H2, W2), dtype=jnp.float32)
    out2 = jax.block_until_ready(ohem_forward(x2, t2, top_k=0.7))
    ref2 = jax.block_until_ready(ohem_reference(x2, t2, top_k=0.7))
    assert jnp.allclose(out2, ref2, rtol=1e-5, atol=1e-5), (out2, ref2)

    print("KERNEL_OK")
</pallas_src>

<mosaic_0001>
module attributes {stable_mosaic.version = 11 : i64} {
  func.func @ohem_sse_kernel(%arg0: i32, %arg1: i32, %arg2: memref<8x1024xf32, #tpu.memory_space<vmem>>, %arg3: memref<8x1024xf32, #tpu.memory_space<vmem>>, %arg4: memref<1x8x128xf32, #tpu.memory_space<vmem>>) attributes {dimension_semantics = [#tpu.dimension_semantics<parallel>, #tpu.dimension_semantics<arbitrary>], iteration_bounds = array<i64: 2, 1>, scalar_prefetch = 0 : i64, scratch_operands = 0 : i64, tpu.core_type = #tpu.core_type<tc>, window_params = [{transform_indices = @transform_0, window_bounds = array<i64: 8, 1024>}, {transform_indices = @transform_1, window_bounds = array<i64: 8, 1024>}, {transform_indices = @transform_2, window_bounds = array<i64: 1, 8, 128>}]} {
    %c0_i32 = arith.constant 0 : i32
    %0 = arith.cmpi eq, %arg1, %c0_i32 : i32
    %1 = arith.extui %0 : i1 to i32
    %c0_i32_0 = arith.constant 0 : i32
    %2 = arith.cmpi ne, %1, %c0_i32_0 : i32
    scf.if %2 {
      %cst = arith.constant 0.000000e+00 : f32
      %13 = vector.broadcast %cst : f32 to vector<8x128xf32>
      %c0 = arith.constant 0 : index
      %c0_5 = arith.constant 0 : index
      %c0_6 = arith.constant 0 : index
      %14 = vector.load %arg4[%c0, %c0_5, %c0_6] : memref<1x8x128xf32, #tpu.memory_space<vmem>>, vector<1x8x128xf32>
      %15 = vector.shape_cast %14 : vector<1x8x128xf32> to vector<8x128xf32>
      %16 = vector.shape_cast %13 : vector<8x128xf32> to vector<1x8x128xf32>
      tpu.vector_store %arg4[%c0, %c0_5, %c0_6], %16 {strides = array<i32>} : memref<1x8x128xf32, #tpu.memory_space<vmem>>, vector<1x8x128xf32>,
    } else {
    }
    %c1_i32 = arith.constant 1 : i32
    %3 = arith.muli %arg0, %c1_i32 : i32
    %4 = arith.addi %3, %arg1 : i32
    %c1024_i32 = arith.constant 1024 : i32
    %5 = arith.muli %4, %c1024_i32 : i32
    %c1024_i32_1 = arith.constant 1024 : i32
    %6 = arith.addi %5, %c1024_i32_1 : i32
    %c1024_i32_2 = arith.constant 1024 : i32
    %7 = arith.cmpi sgt, %6, %c1024_i32_2 : i32
    %true = arith.constant true
    %8 = arith.xori %7, %true : i1
    %9 = arith.extui %8 : i1 to i32
    %c0_i32_3 = arith.constant 0 : i32
    %10 = arith.cmpi ne, %9, %c0_i32_3 : i32
    scf.if %10 {
      %cst = arith.constant 0.000000e+00 : f32
      %13 = vector.broadcast %cst : f32 to vector<8x128xf32>
      %cst_5 = arith.constant 0.000000e+00 : f32
      %14 = vector.broadcast %cst_5 : f32 to vector<8x128xf32>
      %cst_6 = arith.constant 0.000000e+00 : f32
      %15 = vector.broadcast %cst_6 : f32 to vector<8x128xf32>
      %cst_7 = arith.constant 0.000000e+00 : f32
      %16 = vector.broadcast %cst_7 : f32 to vector<8x128xf32>
      %c0_i32_8 = arith.constant 0 : i32
      %c4_i32 = arith.constant 4 : i32
      %17 = arith.muli %c0_i32_8, %c4_i32 : i32
      %c0_i32_9 = arith.constant 0 : i32
      %18 = arith.addi %17, %c0_i32_9 : i32
      %c128_i32 = arith.constant 128 : i32
      %19 = arith.muli %18, %c128_i32 : i32
      %20 = tpu.assume_multiple %19, 128 : i32
      %c0 = arith.constant 0 : index
      %21 = arith.index_cast %20 : i32 to index
      %22 = vector.load %arg2[%c0, %21] : memref<8x1024xf32, #tpu.memory_space<vmem>>, vector<8x128xf32>
      %c0_10 = arith.constant 0 : index
      %23 = arith.index_cast %20 : i32 to index
      %24 = vector.load %arg3[%c0_10, %23] : memref<8x1024xf32, #tpu.memory_space<vmem>>, vector<8x128xf32>
      %25 = arith.subf %22, %24 : vector<8x128xf32>
      %26 = arith.mulf %25, %25 : vector<8x128xf32>
      %27 = arith.addf %13, %26 : vector<8x128xf32>
      %c4_i32_11 = arith.constant 4 : i32
      %28 = arith.muli %c0_i32_8, %c4_i32_11 : i32
      %c1_i32_12 = arith.constant 1 : i32
      %29 = arith.addi %28, %c1_i32_12 : i32
      %c128_i32_13 = arith.constant 128 : i32
      %30 = arith.muli %29, %c128_i32_13 : i32
      %31 = tpu.assume_multiple %30, 128 : i32
      %c0_14 = arith.constant 0 : index
      %32 = arith.index_cast %31 : i32 to index
      %33 = vector.load %arg2[%c0_14, %32] : memref<8x1024xf32, #tpu.memory_space<vmem>>, vector<8x128xf32>
      %c0_15 = arith.constant 0 : index
      %34 = arith.index_cast %31 : i32 to index
      %35 = vector.load %arg3[%c0_15, %34] : memref<8x1024xf32, #tpu.memory_space<vmem>>, vector<8x128xf32>
      %36 = arith.subf %33, %35 : vector<8x128xf32>
      %37 = arith.mulf %36, %36 : vector<8x128xf32>
      %38 = arith.addf %14, %37 : vector<8x128xf32>
      %c4_i32_16 = arith.constant 4 : i32
      %39 = arith.muli %c0_i32_8, %c4_i32_16 : i32
      %c2_i32 = arith.constant 2 : i32
      %40 = arith.addi %39, %c2_i32 : i32
      %c128_i32_17 = arith.constant 128 : i32
      %41 = arith.muli %40, %c128_i32_17 : i32
      %42 = tpu.assume_multiple %41, 128 : i32
      %c0_18 = arith.constant 0 : index
      %43 = arith.index_cast %42 : i32 to index
      %44 = vector.load %arg2[%c0_18, %43] : memref<8x1024xf32, #tpu.memory_space<vmem>>, vector<8x128xf32>
      %c0_19 = arith.constant 0 : index
      %45 = arith.index_cast %42 : i32 to index
      %46 = vector.load %arg3[%c0_19, %45] : memref<8x1024xf32, #tpu.memory_space<vmem>>, vector<8x128xf32>
      %47 = arith.subf %44, %46 : vector<8x128xf32>
      %48 = arith.mulf %47, %47 : vector<8x128xf32>
      %49 = arith.addf %15, %48 : vector<8x128xf32>
      %c4_i32_20 = arith.constant 4 : i32
      %50 = arith.muli %c0_i32_8, %c4_i32_20 : i32
      %c3_i32 = arith.constant 3 : i32
      %51 = arith.addi %50, %c3_i32 : i32
      %c128_i32_21 = arith.constant 128 : i32
      %52 = arith.muli %51, %c128_i32_21 : i32
      %53 = tpu.assume_multiple %52, 128 : i32
      %c0_22 = arith.constant 0 : index
      %54 = arith.index_cast %53 : i32 to index
      %55 = vector.load %arg2[%c0_22, %54] : memref<8x1024xf32, #tpu.memory_space<vmem>>, vector<8x128xf32>
      %c0_23 = arith.constant 0 : index
      %56 = arith.index_cast %53 : i32 to index
      %57 = vector.load %arg3[%c0_23, %56] : memref<8x1024xf32, #tpu.memory_space<vmem>>, vector<8x128xf32>
      %58 = arith.subf %55, %57 : vector<8x128xf32>
      %59 = arith.mulf %58, %58 : vector<8x128xf32>
      %60 = arith.addf %16, %59 : vector<8x128xf32>
      %c1_i32_24 = arith.constant 1 : i32
      %c4_i32_25 = arith.constant 4 : i32
      %61 = arith.muli %c1_i32_24, %c4_i32_25 : i32
      %c0_i32_26 = arith.constant 0 : i32
      %62 = arith.addi %61, %c0_i32_26 : i32
      %c128_i32_27 = arith.constant 128 : i32
      %63 = arith.muli %62, %c128_i32_27 : i32
      %64 = tpu.assume_multiple %63, 128 : i32
      %c0_28 = arith.constant 0 : index
      %65 = arith.index_cast %64 : i32 to index
      %66 = vector.load %arg2[%c0_28, %65] : memref<8x1024xf32, #tpu.memory_space<vmem>>, vector<8x128xf32>
      %c0_29 = arith.constant 0 : index
      %67 = arith.index_cast %64 : i32 to index
      %68 = vector.load %arg3[%c0_29, %67] : memref<8x1024xf32, #tpu.memory_space<vmem>>, vector<8x128xf32>
      %69 = arith.subf %66, %68 : vector<8x128xf32>
      %70 = arith.mulf %69, %69 : vector<8x128xf32>
      %71 = arith.addf %27, %70 : vector<8x128xf32>
      %c4_i32_30 = arith.constant 4 : i32
      %72 = arith.muli %c1_i32_24, %c4_i32_30 : i32
      %c1_i32_31 = arith.constant 1 : i32
      %73 = arith.addi %72, %c1_i32_31 : i32
      %c128_i32_32 = arith.constant 128 : i32
      %74 = arith.muli %73, %c128_i32_32 : i32
      %75 = tpu.assume_multiple %74, 128 : i32
      %c0_33 = arith.constant 0 : index
      %76 = arith.index_cast %75 : i32 to index
      %77 = vector.load %arg2[%c0_33, %76] : memref<8x1024xf32, #tpu.memory_space<vmem>>, vector<8x128xf32>
      %c0_34 = arith.constant 0 : index
      %78 = arith.index_cast %75 : i32 to index
      %79 = vector.load %arg3[%c0_34, %78] : memref<8x1024xf32, #tpu.memory_space<vmem>>, vector<8x128xf32>
      %80 = arith.subf %77, %79 : vector<8x128xf32>
      %81 = arith.mulf %80, %80 : vector<8x128xf32>
      %82 = arith.addf %38, %81 : vector<8x128xf32>
      %c4_i32_35 = arith.constant 4 : i32
      %83 = arith.muli %c1_i32_24, %c4_i32_35 : i32
      %c2_i32_36 = arith.constant 2 : i32
      %84 = arith.addi %83, %c2_i32_36 : i32
      %c128_i32_37 = arith.constant 128 : i32
      %85 = arith.muli %84, %c128_i32_37 : i32
      %86 = tpu.assume_multiple %85, 128 : i32
      %c0_38 = arith.constant 0 : index
      %87 = arith.index_cast %86 : i32 to index
      %88 = vector.load %arg2[%c0_38, %87] : memref<8x1024xf32, #tpu.memory_space<vmem>>, vector<8x128xf32>
      %c0_39 = arith.constant 0 : index
      %89 = arith.index_cast %86 : i32 to index
      %90 = vector.load %arg3[%c0_39, %89] : memref<8x1024xf32, #tpu.memory_space<vmem>>, vector<8x128xf32>
      %91 = arith.subf %88, %90 : vector<8x128xf32>
      %92 = arith.mulf %91, %91 : vector<8x128xf32>
      %93 = arith.addf %49, %92 : vector<8x128xf32>
      %c4_i32_40 = arith.constant 4 : i32
      %94 = arith.muli %c1_i32_24, %c4_i32_40 : i32
      %c3_i32_41 = arith.constant 3 : i32
      %95 = arith.addi %94, %c3_i32_41 : i32
      %c128_i32_42 = arith.constant 128 : i32
      %96 = arith.muli %95, %c128_i32_42 : i32
      %97 = tpu.assume_multiple %96, 128 : i32
      %c0_43 = arith.constant 0 : index
      %98 = arith.index_cast %97 : i32 to index
      %99 = vector.load %arg2[%c0_43, %98] : memref<8x1024xf32, #tpu.memory_space<vmem>>, vector<8x128xf32>
      %c0_44 = arith.constant 0 : index
      %100 = arith.index_cast %97 : i32 to index
      %101 = vector.load %arg3[%c0_44, %100] : memref<8x1024xf32, #tpu.memory_space<vmem>>, vector<8x128xf32>
      %102 = arith.subf %99, %101 : vector<8x128xf32>
      %103 = arith.mulf %102, %102 : vector<8x128xf32>
      %104 = arith.addf %60, %103 : vector<8x128xf32>
      %c2_i32_45 = arith.constant 2 : i32
      %105 = arith.addf %71, %82 : vector<8x128xf32>
      %106 = arith.addf %105, %93 : vector<8x128xf32>
      %107 = arith.addf %106, %104 : vector<8x128xf32>
      %c0_46 = arith.constant 0 : index
      %c0_47 = arith.constant 0 : index
      %c0_48 = arith.constant 0 : index
      %108 = vector.load %arg4[%c0_46, %c0_47, %c0_48] : memref<1x8x128xf32, #tpu.memory_space<vmem>>, vector<1x8x128xf32>
      %109 = vector.shape_cast %108 : vector<1x8x128xf32> to vector<8x128xf32>
      %110 = arith.addf %109, %107 : vector<8x128xf32>
      %c0_49 = arith.constant 0 : index
      %c0_50 = arith.constant 0 : index
      %c0_51 = arith.constant 0 : index
      %111 = vector.load %arg4[%c0_49, %c0_50, %c0_51] : memref<1x8x128xf32, #tpu.memory_space<vmem>>, vector<1x8x128xf32>
      %112 = vector.shape_cast %111 : vector<1x8x128xf32> to vector<8x128xf32>
      %113 = vector.shape_cast %110 : vector<8x128xf32> to vector<1x8x128xf32>
      tpu.vector_store %arg4[%c0_49, %c0_50, %c0_51], %113 {strides = array<i32>} : memref<1x8x128xf32, #tpu.memory_space<vmem>>, vector<1x8x128xf32>,
    } else {
    }
    %11 = arith.extui %7 : i1 to i32
    %c0_i32_4 = arith.constant 0 : i32
    %12 = arith.cmpi ne, %11, %c0_i32_4 : i32
    scf.if %12 {
      %13 = tpu.iota {dimensions = array<i32: 1>} : vector<8x128xi32>
      %cst = arith.constant 0.000000e+00 : f32
      %14 = vector.broadcast %cst : f32 to vector<8x128xf32>
      %cst_5 = arith.constant 0.000000e+00 : f32
      %15 = vector.broadcast %cst_5 : f32 to vector<8x128xf32>
      %cst_6 = arith.constant 0.000000e+00 : f32
      %16 = vector.broadcast %cst_6 : f32 to vector<8x128xf32>
      %cst_7 = arith.constant 0.000000e+00 : f32
      %17 = vector.broadcast %cst_7 : f32 to vector<8x128xf32>
      %c0_i32_8 = arith.constant 0 : i32
      %c4_i32 = arith.constant 4 : i32
      %18 = arith.muli %c0_i32_8, %c4_i32 : i32
      %c0_i32_9 = arith.constant 0 : i32
      %19 = arith.addi %18, %c0_i32_9 : i32
      %c128_i32 = arith.constant 128 : i32
      %20 = arith.muli %19, %c128_i32 : i32
      %21 = tpu.assume_multiple %20, 128 : i32
      %c0 = arith.constant 0 : index
      %22 = arith.index_cast %21 : i32 to index
      %23 = vector.load %arg2[%c0, %22] : memref<8x1024xf32, #tpu.memory_space<vmem>>, vector<8x128xf32>
      %c0_10 = arith.constant 0 : index
      %24 = arith.index_cast %21 : i32 to index
      %25 = vector.load %arg3[%c0_10, %24] : memref<8x1024xf32, #tpu.memory_space<vmem>>, vector<8x128xf32>
      %26 = arith.subf %23, %25 : vector<8x128xf32>
      %27 = arith.mulf %26, %26 : vector<8x128xf32>
      %c128_i32_11 = arith.constant 128 : i32
      %28 = arith.muli %19, %c128_i32_11 : i32
      %29 = arith.addi %5, %28 : i32
      %30 = vector.broadcast %29 : i32 to vector<8x128xi32>
      %31 = arith.addi %30, %13 : vector<8x128xi32>
      %c1024_i32_12 = arith.constant 1024 : i32
      %32 = vector.broadcast %c1024_i32_12 : i32 to vector<8x128xi32>
      %33 = arith.cmpi slt, %31, %32 : vector<8x128xi32>
      %cst_13 = arith.constant 0.000000e+00 : f32
      %34 = vector.broadcast %cst_13 : f32 to vector<8x128xf32>
      %35 = arith.select %33, %27, %34 : vector<8x128xi1>, vector<8x128xf32>
      %36 = arith.addf %14, %35 : vector<8x128xf32>
      %c4_i32_14 = arith.constant 4 : i32
      %37 = arith.muli %c0_i32_8, %c4_i32_14 : i32
      %c1_i32_15 = arith.constant 1 : i32
      %38 = arith.addi %37, %c1_i32_15 : i32
      %c128_i32_16 = arith.constant 128 : i32
      %39 = arith.muli %38, %c128_i32_16 : i32
      %40 = tpu.assume_multiple %39, 128 : i32
      %c0_17 = arith.constant 0 : index
      %41 = arith.index_cast %40 : i32 to index
      %42 = vector.load %arg2[%c0_17, %41] : memref<8x1024xf32, #tpu.memory_space<vmem>>, vector<8x128xf32>
      %c0_18 = arith.constant 0 : index
      %43 = arith.index_cast %40 : i32 to index
      %44 = vector.load %arg3[%c0_18, %43] : memref<8x1024xf32, #tpu.memory_space<vmem>>, vector<8x128xf32>
      %45 = arith.subf %42, %44 : vector<8x128xf32>
      %46 = arith.mulf %45, %45 : vector<8x128xf32>
      %c128_i32_19 = arith.constant 128 : i32
      %47 = arith.muli %38, %c128_i32_19 : i32
      %48 = arith.addi %5, %47 : i32
      %49 = vector.broadcast %48 : i32 to vector<8x128xi32>
      %50 = arith.addi %49, %13 : vector<8x128xi32>
      %c1024_i32_20 = arith.constant 1024 : i32
      %51 = vector.broadcast %c1024_i32_20 : i32 to vector<8x128xi32>
      %52 = arith.cmpi slt, %50, %51 : vector<8x128xi32>
      %cst_21 = arith.constant 0.000000e+00 : f32
      %53 = vector.broadcast %cst_21 : f32 to vector<8x128xf32>
      %54 = arith.select %52, %46, %53 : vector<8x128xi1>, vector<8x128xf32>
      %55 = arith.addf %15, %54 : vector<8x128xf32>
      %c4_i32_22 = arith.constant 4 : i32
      %56 = arith.muli %c0_i32_8, %c4_i32_22 : i32
      %c2_i32 = arith.constant 2 : i32
      %57 = arith.addi %56, %c2_i32 : i32
      %c128_i32_23 = arith.constant 128 : i32
      %58 = arith.muli %57, %c128_i32_23 : i32
      %59 = tpu.assume_multiple %58, 128 : i32
      %c0_24 = arith.constant 0 : index
      %60 = arith.index_cast %59 : i32 to index
      %61 = vector.load %arg2[%c0_24, %60] : memref<8x1024xf32, #tpu.memory_space<vmem>>, vector<8x128xf32>
      %c0_25 = arith.constant 0 : index
      %62 = arith.index_cast %59 : i32 to index
      %63 = vector.load %arg3[%c0_25, %62] : memref<8x1024xf32, #tpu.memory_space<vmem>>, vector<8x128xf32>
      %64 = arith.subf %61, %63 : vector<8x128xf32>
      %65 = arith.mulf %64, %64 : vector<8x128xf32>
      %c128_i32_26 = arith.constant 128 : i32
      %66 = arith.muli %57, %c128_i32_26 : i32
      %67 = arith.addi %5, %66 : i32
      %68 = vector.broadcast %67 : i32 to vector<8x128xi32>
      %69 = arith.addi %68, %13 : vector<8x128xi32>
      %c1024_i32_27 = arith.constant 1024 : i32
      %70 = vector.broadcast %c1024_i32_27 : i32 to vector<8x128xi32>
      %71 = arith.cmpi slt, %69, %70 : vector<8x128xi32>
      %cst_28 = arith.constant 0.000000e+00 : f32
      %72 = vector.broadcast %cst_28 : f32 to vector<8x128xf32>
      %73 = arith.select %71, %65, %72 : vector<8x128xi1>, vector<8x128xf32>
      %74 = arith.addf %16, %73 : vector<8x128xf32>
      %c4_i32_29 = arith.constant 4 : i32
      %75 = arith.muli %c0_i32_8, %c4_i32_29 : i32
      %c3_i32 = arith.constant 3 : i32
      %76 = arith.addi %75, %c3_i32 : i32
      %c128_i32_30 = arith.constant 128 : i32
      %77 = arith.muli %76, %c128_i32_30 : i32
      %78 = tpu.assume_multiple %77, 128 : i32
      %c0_31 = arith.constant 0 : index
      %79 = arith.index_cast %78 : i32 to index
      %80 = vector.load %arg2[%c0_31, %79] : memref<8x1024xf32, #tpu.memory_space<vmem>>, vector<8x128xf32>
      %c0_32 = arith.constant 0 : index
      %81 = arith.index_cast %78 : i32 to index
      %82 = vector.load %arg3[%c0_32, %81] : memref<8x1024xf32, #tpu.memory_space<vmem>>, vector<8x128xf32>
      %83 = arith.subf %80, %82 : vector<8x128xf32>
      %84 = arith.mulf %83, %83 : vector<8x128xf32>
      %c128_i32_33 = arith.constant 128 : i32
      %85 = arith.muli %76, %c128_i32_33 : i32
      %86 = arith.addi %5, %85 : i32
      %87 = vector.broadcast %86 : i32 to vector<8x128xi32>
      %88 = arith.addi %87, %13 : vector<8x128xi32>
      %c1024_i32_34 = arith.constant 1024 : i32
      %89 = vector.broadcast %c1024_i32_34 : i32 to vector<8x128xi32>
      %90 = arith.cmpi slt, %88, %89 : vector<8x128xi32>
      %cst_35 = arith.constant 0.000000e+00 : f32
      %91 = vector.broadcast %cst_35 : f32 to vector<8x128xf32>
      %92 = arith.select %90, %84, %91 : vector<8x128xi1>, vector<8x128xf32>
      %93 = arith.addf %17, %92 : vector<8x128xf32>
      %c1_i32_36 = arith.constant 1 : i32
      %c4_i32_37 = arith.constant 4 : i32
      %94 = arith.muli %c1_i32_36, %c4_i32_37 : i32
      %c0_i32_38 = arith.constant 0 : i32
      %95 = arith.addi %94, %c0_i32_38 : i32
      %c128_i32_39 = arith.constant 128 : i32
      %96 = arith.muli %95, %c128_i32_39 : i32
      %97 = tpu.assume_multiple %96, 128 : i32
      %c0_40 = arith.constant 0 : index
      %98 = arith.index_cast %97 : i32 to index
      %99 = vector.load %arg2[%c0_40, %98] : memref<8x1024xf32, #tpu.memory_space<vmem>>, vector<8x128xf32>
      %c0_41 = arith.constant 0 : index
      %100 = arith.index_cast %97 : i32 to index
      %101 = vector.load %arg3[%c0_41, %100] : memref<8x1024xf32, #tpu.memory_space<vmem>>, vector<8x128xf32>
      %102 = arith.subf %99, %101 : vector<8x128xf32>
      %103 = arith.mulf %102, %102 : vector<8x128xf32>
      %c128_i32_42 = arith.constant 128 : i32
      %104 = arith.muli %95, %c128_i32_42 : i32
      %105 = arith.addi %5, %104 : i32
      %106 = vector.broadcast %105 : i32 to vector<8x128xi32>
      %107 = arith.addi %106, %13 : vector<8x128xi32>
      %c1024_i32_43 = arith.constant 1024 : i32
      %108 = vector.broadcast %c1024_i32_43 : i32 to vector<8x128xi32>
      %109 = arith.cmpi slt, %107, %108 : vector<8x128xi32>
      %cst_44 = arith.constant 0.000000e+00 : f32
      %110 = vector.broadcast %cst_44 : f32 to vector<8x128xf32>
      %111 = arith.select %109, %103, %110 : vector<8x128xi1>, vector<8x128xf32>
      %112 = arith.addf %36, %111 : vector<8x128xf32>
      %c4_i32_45 = arith.constant 4 : i32
      %113 = arith.muli %c1_i32_36, %c4_i32_45 : i32
      %c1_i32_46 = arith.constant 1 : i32
      %114 = arith.addi %113, %c1_i32_46 : i32
      %c128_i32_47 = arith.constant 128 : i32
      %115 = arith.muli %114, %c128_i32_47 : i32
      %116 = tpu.assume_multiple %115, 128 : i32
      %c0_48 = arith.constant 0 : index
      %117 = arith.index_cast %116 : i32 to index
      %118 = vector.load %arg2[%c0_48, %117] : memref<8x1024xf32, #tpu.memory_space<vmem>>, vector<8x128xf32>
      %c0_49 = arith.constant 0 : index
      %119 = arith.index_cast %116 : i32 to index
      %120 = vector.load %arg3[%c0_49, %119] : memref<8x1024xf32, #tpu.memory_space<vmem>>, vector<8x128xf32>
      %121 = arith.subf %118, %120 : vector<8x128xf32>
      %122 = arith.mulf %121, %121 : vector<8x128xf32>
      %c128_i32_50 = arith.constant 128 : i32
      %123 = arith.muli %114, %c128_i32_50 : i32
      %124 = arith.addi %5, %123 : i32
      %125 = vector.broadcast %124 : i32 to vector<8x128xi32>
      %126 = arith.addi %125, %13 : vector<8x128xi32>
      %c1024_i32_51 = arith.constant 1024 : i32
      %127 = vector.broadcast %c1024_i32_51 : i32 to vector<8x128xi32>
      %128 = arith.cmpi slt, %126, %127 : vector<8x128xi32>
      %cst_52 = arith.constant 0.000000e+00 : f32
      %129 = vector.broadcast %cst_52 : f32 to vector<8x128xf32>
      %130 = arith.select %128, %122, %129 : vector<8x128xi1>, vector<8x128xf32>
      %131 = arith.addf %55, %130 : vector<8x128xf32>
      %c4_i32_53 = arith.constant 4 : i32
      %132 = arith.muli %c1_i32_36, %c4_i32_53 : i32
      %c2_i32_54 = arith.constant 2 : i32
      %133 = arith.addi %132, %c2_i32_54 : i32
      %c128_i32_55 = arith.constant 128 : i32
      %134 = arith.muli %133, %c128_i32_55 : i32
      %135 = tpu.assume_multiple %134, 128 : i32
      %c0_56 = arith.constant 0 : index
      %136 = arith.index_cast %135 : i32 to index
      %137 = vector.load %arg2[%c0_56, %136] : memref<8x1024xf32, #tpu.memory_space<vmem>>, vector<8x128xf32>
      %c0_57 = arith.constant 0 : index
      %138 = arith.index_cast %135 : i32 to index
      %139 = vector.load %arg3[%c0_57, %138] : memref<8x1024xf32, #tpu.memory_space<vmem>>, vector<8x128xf32>
      %140 = arith.subf %137, %139 : vector<8x128xf32>
      %141 = arith.mulf %140, %140 : vector<8x128xf32>
      %c128_i32_58 = arith.constant 128 : i32
      %142 = arith.muli %133, %c128_i32_58 : i32
      %143 = arith.addi %5, %142 : i32
      %144 = vector.broadcast %143 : i32 to vector<8x128xi32>
      %145 = arith.addi %144, %13 : vector<8x128xi32>
      %c1024_i32_59 = arith.constant 1024 : i32
      %146 = vector.broadcast %c1024_i32_59 : i32 to vector<8x128xi32>
      %147 = arith.cmpi slt, %145, %146 : vector<8x128xi32>
      %cst_60 = arith.constant 0.000000e+00 : f32
      %148 = vector.broadcast %cst_60 : f32 to vector<8x128xf32>
      %149 = arith.select %147, %141, %148 : vector<8x128xi1>, vector<8x128xf32>
      %150 = arith.addf %74, %149 : vector<8x128xf32>
      %c4_i32_61 = arith.constant 4 : i32
      %151 = arith.muli %c1_i32_36, %c4_i32_61 : i32
      %c3_i32_62 = arith.constant 3 : i32
      %152 = arith.addi %151, %c3_i32_62 : i32
      %c128_i32_63 = arith.constant 128 : i32
      %153 = arith.muli %152, %c128_i32_63 : i32
      %154 = tpu.assume_multiple %153, 128 : i32
      %c0_64 = arith.constant 0 : index
      %155 = arith.index_cast %154 : i32 to index
      %156 = vector.load %arg2[%c0_64, %155] : memref<8x1024xf32, #tpu.memory_space<vmem>>, vector<8x128xf32>
      %c0_65 = arith.constant 0 : index
      %157 = arith.index_cast %154 : i32 to index
      %158 = vector.load %arg3[%c0_65, %157] : memref<8x1024xf32, #tpu.memory_space<vmem>>, vector<8x128xf32>
      %159 = arith.subf %156, %158 : vector<8x128xf32>
      %160 = arith.mulf %159, %159 : vector<8x128xf32>
      %c128_i32_66 = arith.constant 128 : i32
      %161 = arith.muli %152, %c128_i32_66 : i32
      %162 = arith.addi %5, %161 : i32
      %163 = vector.broadcast %162 : i32 to vector<8x128xi32>
      %164 = arith.addi %163, %13 : vector<8x128xi32>
      %c1024_i32_67 = arith.constant 1024 : i32
      %165 = vector.broadcast %c1024_i32_67 : i32 to vector<8x128xi32>
      %166 = arith.cmpi slt, %164, %165 : vector<8x128xi32>
      %cst_68 = arith.constant 0.000000e+00 : f32
      %167 = vector.broadcast %cst_68 : f32 to vector<8x128xf32>
      %168 = arith.select %166, %160, %167 : vector<8x128xi1>, vector<8x128xf32>
      %169 = arith.addf %93, %168 : vector<8x128xf32>
      %c2_i32_69 = arith.constant 2 : i32
      %170 = arith.addf %112, %131 : vector<8x128xf32>
      %171 = arith.addf %170, %150 : vector<8x128xf32>
      %172 = arith.addf %171, %169 : vector<8x128xf32>
      %c0_70 = arith.constant 0 : index
      %c0_71 = arith.constant 0 : index
      %c0_72 = arith.constant 0 : index
      %173 = vector.load %arg4[%c0_70, %c0_71, %c0_72] : memref<1x8x128xf32, #tpu.memory_space<vmem>>, vector<1x8x128xf32>
      %174 = vector.shape_cast %173 : vector<1x8x128xf32> to vector<8x128xf32>
      %175 = arith.addf %174, %172 : vector<8x128xf32>
      %c0_73 = arith.constant 0 : index
      %c0_74 = arith.constant 0 : index
      %c0_75 = arith.constant 0 : index
      %176 = vector.load %arg4[%c0_73, %c0_74, %c0_75] : memref<1x8x128xf32, #tpu.memory_space<vmem>>, vector<1x8x128xf32>
      %177 = vector.shape_cast %176 : vector<1x8x128xf32> to vector<8x128xf32>
      %178 = vector.shape_cast %175 : vector<8x128xf32> to vector<1x8x128xf32>
      tpu.vector_store %arg4[%c0_73, %c0_74, %c0_75], %178 {strides = array<i32>} : memref<1x8x128xf32, #tpu.memory_space<vmem>>, vector<1x8x128xf32>,
    } else {
    }
    return
  }
  func.func @transform_0(%arg0: i32, %arg1: i32) -> (i32, i32) {
    %c1_i32 = arith.constant 1 : i32
    %0 = arith.muli %arg0, %c1_i32 : i32
    %1 = arith.addi %0, %arg1 : i32
    %c0_i32 = arith.constant 0 : i32
    %2 = arith.minsi %1, %c0_i32 : i32
    %c0_i32_0 = arith.constant 0 : i32
    %c0_i32_1 = arith.constant 0 : i32
    return %c0_i32_0, %2 : i32, i32
  }
  func.func @transform_1(%arg0: i32, %arg1: i32) -> (i32, i32) {
    %c1_i32 = arith.constant 1 : i32
    %0 = arith.muli %arg0, %c1_i32 : i32
    %1 = arith.addi %0, %arg1 : i32
    %c0_i32 = arith.constant 0 : i32
    %2 = arith.minsi %1, %c0_i32 : i32
    %c0_i32_0 = arith.constant 0 : i32
    %c0_i32_1 = arith.constant 0 : i32
    return %c0_i32_0, %2 : i32, i32
  }
  func.func @transform_2(%arg0: i32, %arg1: i32) -> (i32, i32, i32) {
    %c0_i32 = arith.constant 0 : i32
    %c0_i32_0 = arith.constant 0 : i32
    %c0_i32_1 = arith.constant 0 : i32
    return %arg0, %c0_i32, %c0_i32_0 : i32, i32, i32
  }
}

</mosaic_0001>

<llo_original>
// kernel: tpu_custom_call.1
$region0: #{tpu_custom_call.1}
  #allocation0 [shape = 'u32[]', space=smem, size = 0x4, offset = 0x4, fixed_abs, tag = 'smem constant byte address 0x4 - core index']
  #allocation1 [shape = 'u32[72,128]{1,0:T(1,128)}', space=vmem, size = 0x9000, scoped, tag = 'internal scratch']
  %s0 = inlined_call_operand.hbm [shape: f32[8,1024], index: 0, kind: input, shape index: {}]
  %s1 = inlined_call_operand.hbm [shape: f32[8,1024], index: 1, kind: input, shape index: {}]
  %s2 = inlined_call_operand.hbm [shape: f32[2,8,128], index: 2, kind: output, shape index: {}]
  %s3 = sld [smem:[#allocation0]]
  $region61: #{tpu_custom_call.1} parent=0
    _
  %s5 = ssub.s32 1, %s3
  %s6 = scalar_select 0, %s5, %s3
  $region1: #{tpu_custom_call.1} parent=0
    #allocation2 [shape = 'u8[65536]{0}', space=vmem, size = 0x10000, scoped, tag = 'input window, operand 0']
    #allocation3 [shape = 's32[2]{0}', space=sflag, size = 0x8, scoped, tag = 'scoped memory for tpu_custom_call.1']
    #allocation4 [shape = 's32[2]{0}', space=sflag, size = 0x8, scoped, tag = 'scoped memory for tpu_custom_call.1']
    #allocation5 [shape = 'u8[65536]{0}', space=vmem, size = 0x10000, scoped, tag = 'input window, operand 1']
    #allocation6 [shape = 's32[2]{0}', space=sflag, size = 0x8, scoped, tag = 'scoped memory for tpu_custom_call.1']
    #allocation7 [shape = 'u8[8192]{0}', space=vmem, size = 0x2000, scoped, tag = 'output window, operand 0']
    %7 = vsyncpa [#allocation3], 0
    %s8 = scalar_lea.sflag [#allocation3], 1
    %9 = vsyncpa %s8, 0
    %10 = vsyncpa [#allocation6], 0
    %s11 = scalar_lea.sflag [#allocation6], 1
    %12 = vsyncpa %s11, 0
    %13 = vsyncpa [#allocation4], 0
    %s14 = scalar_lea.sflag [#allocation4], 1
    %15 = vsyncpa %s14, 0
    loop: start=0, step=1, limit=4
    $region2: #{tpu_custom_call.1} parent=1 // loop_pre_header
      _
    $region3: #{tpu_custom_call.1} parent=1 // loop_header
      %s17 = sphi 0, %s21
      %p18 = scmp.ge.s32.totalorder %s17, 4
      %s24 = sphi 0, %s36
      %s25 = sphi 0, %s32
      %s26 = sphi 0, %s24
      %s27 = sphi 0, %s25
      %s28 = sphi 0, %s26
      %s29 = sphi 0, %s27
      %s45 = sphi 0, %s47
      %s48 = sphi 0, %s45
      %s49 = sphi 0, %s48
      %s65 = sphi 0, %s49
      %s77 = sphi 0, %s79
      %s80 = sphi 0, %s77
      %s81 = sphi 0, %s80
      %s97 = sphi 0, %s81
      %s103 = sphi 0, %s105
      %s106 = sphi 0, %s103
      %s107 = sphi 0, %s106
      %s123 = sphi 0, %s107
    $region4: #{tpu_custom_call.1} parent=1 // loop_header_branch
      %20 = sbr.rel (%p18) target = $region8
    $region5: #{tpu_custom_call.1} parent=1 // loop_body
      %s22 = ssub.s32 %s17, 1
      %s23 = ssub.s32 %s17, 2
      %s30 = sadd.s32 1, %s25
      %p31 = scmp.ge.s32.totalorder %s30, 1
      %s32 = scalar_select %p31, 0, %s30
      %s33 = sadd.s32 1, %s24
      %s34 = scalar_select %p31, %s33, %s24
      %p35 = scmp.ge.s32.totalorder %s34, 2
      %s36 = scalar_select %p35, 0, %s34
      %s37 = sadd.s32 %s24, %s25
      %p38 = scmp.lt.s32.totalorder %s37, 0
      %s39 = scalar_select %p38, %s37, 0
      %s40 = sadd.s32 %s36, %s32
      %p41 = scmp.lt.s32.totalorder %s40, 0
      %s42 = scalar_select %p41, %s40, 0
      %s43 = ssub.s32 %s39, %s42
      %p44 = scmp.eq.s32.totalorder %s43, 0
      %s46 = sadd.s32 %s45, 1
      %s47 = scalar_select %p44, %s45, %s46
      %p50 = pneg %p44
      %p51 = scmp.eq.s32.totalorder %s17, 1
      %p52 = por %p50, %p51
      %p53 = scmp.ne.s32.totalorder %s45, %s48
      %p54 = scmp.eq.s32.totalorder %s17, 0
      %p55 = por %p53, %p54
      %p56 = scmp.ne.s32.totalorder %s45, %s48
      %p57 = scmp.eq.s32.totalorder %s22, 1
      %p58 = por %p56, %p57
      %p59 = scmp.ne.s32.totalorder %s48, %s49
      %p60 = scmp.eq.s32.totalorder %s22, 0
      %p61 = por %p59, %p60
      %p62 = scmp.ne.s32.totalorder %s48, %s49
      %p63 = scmp.eq.s32.totalorder %s23, 1
      %p64 = por %p62, %p63
      %p66 = scmp.ne.s32.totalorder %s49, %s65
      %p67 = scmp.eq.s32.totalorder %s23, 0
      %p68 = por %p66, %p67
      %s69 = sadd.s32 %s24, %s25
      %p70 = scmp.lt.s32.totalorder %s69, 0
      %s71 = scalar_select %p70, %s69, 0
      %s72 = sadd.s32 %s36, %s32
      %p73 = scmp.lt.s32.totalorder %s72, 0
      %s74 = scalar_select %p73, %s72, 0
      %s75 = ssub.s32 %s71, %s74
      %p76 = scmp.eq.s32.totalorder %s75, 0
      %s78 = sadd.s32 %s77, 1
      %s79 = scalar_select %p76, %s77, %s78
      %p82 = pneg %p76
      %p83 = scmp.eq.s32.totalorder %s17, 1
      %p84 = por %p82, %p83
      %p85 = scmp.ne.s32.totalorder %s77, %s80
      %p86 = scmp.eq.s32.totalorder %s17, 0
      %p87 = por %p85, %p86
      %p88 = scmp.ne.s32.totalorder %s77, %s80
      %p89 = scmp.eq.s32.totalorder %s22, 1
      %p90 = por %p88, %p89
      %p91 = scmp.ne.s32.totalorder %s80, %s81
      %p92 = scmp.eq.s32.totalorder %s22, 0
      %p93 = por %p91, %p92
      %p94 = scmp.ne.s32.totalorder %s80, %s81
      %p95 = scmp.eq.s32.totalorder %s23, 1
      %p96 = por %p94, %p95
      %p98 = scmp.ne.s32.totalorder %s81, %s97
      %p99 = scmp.eq.s32.totalorder %s23, 0
      %p100 = por %p98, %p99
      %s101 = ssub.s32 %s24, %s36
      %p102 = scmp.eq.s32.totalorder %s101, 0
      %s104 = sadd.s32 %s103, 1
      %s105 = scalar_select %p102, %s103, %s104
      %p108 = pneg %p102
      %p109 = scmp.eq.s32.totalorder %s17, 1
      %p110 = por %p108, %p109
      %p111 = scmp.ne.s32.totalorder %s103, %s106
      %p112 = scmp.eq.s32.totalorder %s17, 0
      %p113 = por %p111, %p112
      %p114 = scmp.ne.s32.totalorder %s103, %s106
      %p115 = scmp.eq.s32.totalorder %s22, 1
      %p116 = por %p114, %p115
      %p117 = scmp.ne.s32.totalorder %s106, %s107
      %p118 = scmp.eq.s32.totalorder %s22, 0
      %p119 = por %p117, %p118
      %p120 = scmp.ne.s32.totalorder %s106, %s107
      %p121 = scmp.eq.s32.totalorder %s23, 1
      %p122 = por %p120, %p121
      %p124 = scmp.ne.s32.totalorder %s107, %s123
      %p125 = scmp.eq.s32.totalorder %s23, 0
      %p126 = por %p124, %p125
      %p127 = scmp.le.s32.totalorder 1, %s17
      %p128 = scmp.lt.s32.totalorder %s17, 3
      %p129 = pnand %p127, %p128
      %p130 = pneg %p129
      // Predicated region
      $region9: #{tpu_custom_call.1} parent=5 // pred_check
        _
      $region10: #{tpu_custom_call.1} parent=5 // pred_check_branch
        %132 = sbr.rel (%p129) target = $region12
      $region11: #{tpu_custom_call.1} parent=5 // pred_region
        %s133 = ssub.s32 %s17, 1
      $region12: #{tpu_custom_call.1} parent=5 // pred_fallthru
        _
      %p134 = scmp.lt.s32.totalorder %s17, 2
      // Predicated region
      $region13: #{tpu_custom_call.1} parent=5 // pred_check
        %p135 = pneg %p134
      $region14: #{tpu_custom_call.1} parent=5 // pred_check_branch
        %137 = sbr.rel (%p135) target = $region16
      $region15: #{tpu_custom_call.1} parent=5 // pred_region
        // Predicated region
        $region17: #{tpu_custom_call.1} parent=15 // pred_check
          %p138 = pneg %p55
        $region18: #{tpu_custom_call.1} parent=15 // pred_check_branch
          %140 = sbr.rel (%p138) target = $region20
        $region19: #{tpu_custom_call.1} parent=15 // pred_region
          %s141 = sand.u32 %s45, 1
          %s142 = scalar_lea.sflag [#allocation3], %s141
          %s143 = sand.u32 %s45, 1
          %s144 = smul.addr %s143, 64
          %s145 = scalar_lea.vmem [#allocation2], %s144
          %s146 = sadd.s32 %s24, %s25
          %p147 = scmp.lt.s32.totalorder %s146, 0
          %s148 = scalar_select %p147, %s146, 0
          %s149 = smul.u32 8, %s148
          %151 = vsyncadd %s142, 0
          %s152 = smul.addr %s149, 8
          %s153 = scalar_lea.hbm %s0, %s152
          %s155 = sshll.u32 %s153, 4
          %s156 = int_to_ptr.hbm [resolvable:$true] %s155
          %s157 = sshll.u32 %s145, 4
          %s158 = int_to_ptr.vmem [resolvable:$true] %s157
          %160 = dma.hbm_to_vmem [thread:$0]  %s156, 1024, %s158, %s142
        $region20: #{tpu_custom_call.1} parent=15 // pred_fallthru
          _
        // Predicated region
        $region21: #{tpu_custom_call.1} parent=15 // pred_check
          %p161 = pneg %p87
        $region22: #{tpu_custom_call.1} parent=15 // pred_check_branch
          %163 = sbr.rel (%p161) target = $region24
        $region23: #{tpu_custom_call.1} parent=15 // pred_region
          %s164 = sand.u32 %s77, 1
          %s165 = scalar_lea.sflag [#allocation6], %s164
          %s166 = sand.u32 %s77, 1
          %s167 = smul.addr %s166, 64
          %s168 = scalar_lea.vmem [#allocation5], %s167
          %s169 = sadd.s32 %s24, %s25
          %p170 = scmp.lt.s32.totalorder %s169, 0
          %s171 = scalar_select %p170, %s169, 0
          %s172 = smul.u32 8, %s171
          %174 = vsyncadd %s165, 0
          %s175 = smul.addr %s172, 8
          %s176 = scalar_lea.hbm %s1, %s175
          %s178 = sshll.u32 %s176, 4
          %s179 = int_to_ptr.hbm [resolvable:$true] %s178
          %s180 = sshll.u32 %s168, 4
          %s181 = int_to_ptr.vmem [resolvable:$true] %s180
          %183 = dma.hbm_to_vmem [thread:$0]  %s179, 1024, %s181, %s165
        $region24: #{tpu_custom_call.1} parent=15 // pred_fallthru
          _
      $region16: #{tpu_custom_call.1} parent=5 // pred_fallthru
        _
      %p184 = scmp.le.s32.totalorder 1, %s17
      %p185 = scmp.lt.s32.totalorder %s17, 3
      %p186 = pnand %p184, %p185
      %p187 = pneg %p186
      // Predicated region
      $region25: #{tpu_custom_call.1} parent=5 // pred_check
        _
      $region26: #{tpu_custom_call.1} parent=5 // pred_check_branch
        %189 = sbr.rel (%p186) target = $region28
      $region27: #{tpu_custom_call.1} parent=5 // pred_region
        %s190 = ssub.s32 %s17, 1
        %s191 = sand.u32 %s48, 1
        %s192 = scalar_lea.sflag [#allocation3], %s191
        %s193 = sand.u32 %s48, 1
        %s194 = smul.addr %s193, 64
        %s195 = scalar_lea.vmem [#allocation2], %s194
        // Predicated region
        $region29: #{tpu_custom_call.1} parent=27 // pred_check
          %p196 = pneg %p61
        $region30: #{tpu_custom_call.1} parent=27 // pred_check_branch
          %198 = sbr.rel (%p196) target = $region32
        $region31: #{tpu_custom_call.1} parent=27 // pred_region
          %200 = dma.done %s192, 1024
        $region32: #{tpu_custom_call.1} parent=27 // pred_fallthru
          _
        %s201 = sand.u32 %s80, 1
        %s202 = scalar_lea.sflag [#allocation6], %s201
        %s203 = sand.u32 %s80, 1
        %s204 = smul.addr %s203, 64
        %s205 = scalar_lea.vmem [#allocation5], %s204
        // Predicated region
        $region33: #{tpu_custom_call.1} parent=27 // pred_check
          %p206 = pneg %p93
        $region34: #{tpu_custom_call.1} parent=27 // pred_check_branch
          %208 = sbr.rel (%p206) target = $region36
        $region35: #{tpu_custom_call.1} parent=27 // pred_region
          %210 = dma.done %s202, 1024
        $region36: #{tpu_custom_call.1} parent=27 // pred_fallthru
          _
        %s211 = sand.u32 %s48, 1
        %s212 = scalar_lea.sflag [#allocation3], %s211
        %s213 = sand.u32 %s48, 1
        %s214 = smul.addr %s213, 64
        %s215 = scalar_lea.vmem [#allocation2], %s214
        %p216 = pneg %p61
        %p217 = pneg %p58
        %s218 = sand.u32 %s80, 1
        %s219 = scalar_lea.sflag [#allocation6], %s218
        %s220 = sand.u32 %s80, 1
        %s221 = smul.addr %s220, 64
        %s222 = scalar_lea.vmem [#allocation5], %s221
        %p223 = pneg %p93
        %p224 = pneg %p90
        %p225 = pneg %p119
        %p226 = pneg %p116
        %s227 = sand.u32 %s106, 1
        %s228 = scalar_lea.sflag [#allocation4], %s227
        %s229 = sand.u32 %s106, 1
        %s230 = smul.addr %s229, 8
        %s231 = scalar_lea.vmem [#allocation7], %s230
        %s232 = sadd.s32 %s26, %s27
        %p233 = scmp.lt.s32.totalorder %s232, 0
        %s234 = scalar_select %p233, %s232, 0
        %s235 = smul.u32 8, %s234
        %s236 = sadd.s32 %s26, %s27
        %p237 = scmp.lt.s32.totalorder %s236, 0
        %s238 = scalar_select %p237, %s236, 0
        %s239 = smul.u32 8, %s238
        %p240 = scmp.eq.s32.totalorder %s27, 0
        // Predicated region
        $region37: #{tpu_custom_call.1} parent=27 // pred_check
          %p241 = pneg %p240
        $region38: #{tpu_custom_call.1} parent=27 // pred_check_branch
          %243 = sbr.rel (%p241) target = $region40
        $region39: #{tpu_custom_call.1} parent=27 // pred_region
          %244 = vst [vmem:[%s231] sm:$0xff] 0.0
        $region40: #{tpu_custom_call.1} parent=27 // pred_fallthru
          _
        %s245 = sadd.s32 %s26, %s27
        %s246 = smul.u32 %s245, 1024
        %s247 = sadd.s32 %s246, 1024
        %p248 = scmp.gt.s32.totalorder %s247, 1024
        %p249 = scmp.le.s32.totalorder %s247, 1024
        // Predicated region
        $region41: #{tpu_custom_call.1} parent=27 // pred_check
          %p250 = pneg %p249
        $region42: #{tpu_custom_call.1} parent=27 // pred_check_branch
          %252 = sbr.rel (%p250) target = $region44
        $region43: #{tpu_custom_call.1} parent=27 // pred_region
          %v253 = vld [vmem:[%s195] sm:$0xff]
          %v254 = vld [vmem:[%s205] sm:$0xff]
          %v255 = vsub.f32 %v253, %v254
          %v256 = vmul.f32 %v255, %v255
          %v257 = vadd.f32 %v256, 0.0
          %s258 = scalar_lea.vmem %s195, 8 [#allocation2]
          %v259 = vld [vmem:[%s258] sm:$0xff]
          %s260 = scalar_lea.vmem %s205, 8 [#allocation5]
          %v261 = vld [vmem:[%s260] sm:$0xff]
          %v262 = vsub.f32 %v259, %v261
          %v263 = vmul.f32 %v262, %v262
          %v264 = vadd.f32 %v263, 0.0
          %s265 = scalar_lea.vmem %s195, 16 [#allocation2]
          %v266 = vld [vmem:[%s265] sm:$0xff]
          %s267 = scalar_lea.vmem %s205, 16 [#allocation5]
          %v268 = vld [vmem:[%s267] sm:$0xff]
          %v269 = vsub.f32 %v266, %v268
          %v270 = vmul.f32 %v269, %v269
          %v271 = vadd.f32 %v270, 0.0
          %s272 = scalar_lea.vmem %s195, 24 [#allocation2]
          %v273 = vld [vmem:[%s272] sm:$0xff]
          %s274 = scalar_lea.vmem %s205, 24 [#allocation5]
          %v275 = vld [vmem:[%s274] sm:$0xff]
          %v276 = vsub.f32 %v273, %v275
          %v277 = vmul.f32 %v276, %v276
          %v278 = vadd.f32 %v277, 0.0
          %s279 = scalar_lea.vmem %s195, 32 [#allocation2]
          %v280 = vld [vmem:[%s279] sm:$0xff]
          %s281 = scalar_lea.vmem %s205, 32 [#allocation5]
          %v282 = vld [vmem:[%s281] sm:$0xff]
          %v283 = vsub.f32 %v280, %v282
          %v284 = vmul.f32 %v283, %v283
          %v285 = vadd.f32 %v257, %v284
          %s286 = scalar_lea.vmem %s195, 40 [#allocation2]
          %v287 = vld [vmem:[%s286] sm:$0xff]
          %s288 = scalar_lea.vmem %s205, 40 [#allocation5]
          %v289 = vld [vmem:[%s288] sm:$0xff]
          %v290 = vsub.f32 %v287, %v289
          %v291 = vmul.f32 %v290, %v290
          %v292 = vadd.f32 %v264, %v291
          %s293 = scalar_lea.vmem %s195, 48 [#allocation2]
          %v294 = vld [vmem:[%s293] sm:$0xff]
          %s295 = scalar_lea.vmem %s205, 48 [#allocation5]
          %v296 = vld [vmem:[%s295] sm:$0xff]
          %v297 = vsub.f32 %v294, %v296
          %v298 = vmul.f32 %v297, %v297
          %v299 = vadd.f32 %v271, %v298
          %s300 = scalar_lea.vmem %s195, 56 [#allocation2]
          %v301 = vld [vmem:[%s300] sm:$0xff]
          %s302 = scalar_lea.vmem %s205, 56 [#allocation5]
          %v303 = vld [vmem:[%s302] sm:$0xff]
          %v304 = vsub.f32 %v301, %v303
          %v305 = vmul.f32 %v304, %v304
          %v306 = vadd.f32 %v278, %v305
          %v307 = vadd.f32 %v285, %v292
          %v308 = vadd.f32 %v307, %v299
          %v309 = vadd.f32 %v308, %v306
          %v310 = vld [vmem:[%s231] sm:$0xff]
          %v311 = vadd.f32 %v310, %v309
          %312 = vst [vmem:[%s231] sm:$0xff] %v311
        $region44: #{tpu_custom_call.1} parent=27 // pred_fallthru
          _
        // Predicated region
        $region45: #{tpu_custom_call.1} parent=27 // pred_check
          %p313 = pneg %p248
        $region46: #{tpu_custom_call.1} parent=27 // pred_check_branch
          %315 = sbr.rel (%p313) target = $region48
        $region47: #{tpu_custom_call.1} parent=27 // pred_region
          %v316 = vlaneseq
          %v317 = vand.u32 %v316, 127
          %v318 = vld [vmem:[%s195] sm:$0xff]
          %v319 = vld [vmem:[%s205] sm:$0xff]
          %v320 = vsub.f32 %v318, %v319
          %v321 = vmul.f32 %v320, %v320
          %v322 = vstv %s246
          %v323 = vadd.s32 %v322, %v317
          %vm324 = vcmp.lt.s32.totalorder %v323, 1024
          %v325 = vsel %vm324, %v321, 0.0
          %v326 = vadd.f32 %v325, 0.0
          %s327 = scalar_lea.vmem %s195, 8 [#allocation2]
          %v328 = vld [vmem:[%s327] sm:$0xff]
          %s329 = scalar_lea.vmem %s205, 8 [#allocation5]
          %v330 = vld [vmem:[%s329] sm:$0xff]
          %v331 = vsub.f32 %v328, %v330
          %v332 = vmul.f32 %v331, %v331
          %s333 = sadd.s32 %s246, 128
          %v334 = vstv %s333
          %v335 = vadd.s32 %v334, %v317
          %vm336 = vcmp.lt.s32.totalorder %v335, 1024
          %v337 = vsel %vm336, %v332, 0.0
          %v338 = vadd.f32 %v337, 0.0
          %s339 = scalar_lea.vmem %s195, 16 [#allocation2]
          %v340 = vld [vmem:[%s339] sm:$0xff]
          %s341 = scalar_lea.vmem %s205, 16 [#allocation5]
          %v342 = vld [vmem:[%s341] sm:$0xff]
          %v343 = vsub.f32 %v340, %v342
          %v344 = vmul.f32 %v343, %v343
          %s345 = sadd.s32 %s246, 256
          %v346 = vstv %s345
          %v347 = vadd.s32 %v346, %v317
          %vm348 = vcmp.lt.s32.totalorder %v347, 1024
          %v349 = vsel %vm348, %v344, 0.0
          %v350 = vadd.f32 %v349, 0.0
          %s351 = scalar_lea.vmem %s195, 24 [#allocation2]
          %v352 = vld [vmem:[%s351] sm:$0xff]
          %s353 = scalar_lea.vmem %s205, 24 [#allocation5]
          %v354 = vld [vmem:[%s353] sm:$0xff]
          %v355 = vsub.f32 %v352, %v354
          %v356 = vmul.f32 %v355, %v355
          %s357 = sadd.s32 %s246, 384
          %v358 = vstv %s357
          %v359 = vadd.s32 %v358, %v317
          %vm360 = vcmp.lt.s32.totalorder %v359, 1024
          %v361 = vsel %vm360, %v356, 0.0
          %v362 = vadd.f32 %v361, 0.0
          %s363 = scalar_lea.vmem %s195, 32 [#allocation2]
          %v364 = vld [vmem:[%s363] sm:$0xff]
          %s365 = scalar_lea.vmem %s205, 32 [#allocation5]
          %v366 = vld [vmem:[%s365] sm:$0xff]
          %v367 = vsub.f32 %v364, %v366
          %v368 = vmul.f32 %v367, %v367
          %s369 = sadd.s32 %s246, 512
          %v370 = vstv %s369
          %v371 = vadd.s32 %v370, %v317
          %vm372 = vcmp.lt.s32.totalorder %v371, 1024
          %v373 = vsel %vm372, %v368, 0.0
          %v374 = vadd.f32 %v326, %v373
          %s375 = scalar_lea.vmem %s195, 40 [#allocation2]
          %v376 = vld [vmem:[%s375] sm:$0xff]
          %s377 = scalar_lea.vmem %s205, 40 [#allocation5]
          %v378 = vld [vmem:[%s377] sm:$0xff]
          %v379 = vsub.f32 %v376, %v378
          %v380 = vmul.f32 %v379, %v379
          %s381 = sadd.s32 %s246, 640
          %v382 = vstv %s381
          %v383 = vadd.s32 %v382, %v317
          %vm384 = vcmp.lt.s32.totalorder %v383, 1024
          %v385 = vsel %vm384, %v380, 0.0
          %v386 = vadd.f32 %v338, %v385
          %s387 = scalar_lea.vmem %s195, 48 [#allocation2]
          %v388 = vld [vmem:[%s387] sm:$0xff]
          %s389 = scalar_lea.vmem %s205, 48 [#allocation5]
          %v390 = vld [vmem:[%s389] sm:$0xff]
          %v391 = vsub.f32 %v388, %v390
          %v392 = vmul.f32 %v391, %v391
          %s393 = sadd.s32 %s246, 768
          %v394 = vstv %s393
          %v395 = vadd.s32 %v394, %v317
          %vm396 = vcmp.lt.s32.totalorder %v395, 1024
          %v397 = vsel %vm396, %v392, 0.0
          %v398 = vadd.f32 %v350, %v397
          %s399 = scalar_lea.vmem %s195, 56 [#allocation2]
          %v400 = vld [vmem:[%s399] sm:$0xff]
          %s401 = scalar_lea.vmem %s205, 56 [#allocation5]
          %v402 = vld [vmem:[%s401] sm:$0xff]
          %v403 = vsub.f32 %v400, %v402
          %v404 = vmul.f32 %v403, %v403
          %s405 = sadd.s32 %s246, 896
          %v406 = vstv %s405
          %v407 = vadd.s32 %v406, %v317
          %vm408 = vcmp.lt.s32.totalorder %v407, 1024
          %v409 = vsel %vm408, %v404, 0.0
          %v410 = vadd.f32 %v362, %v409
          %v411 = vadd.f32 %v374, %v386
          %v412 = vadd.f32 %v411, %v398
          %v413 = vadd.f32 %v412, %v410
          %v414 = vld [vmem:[%s231] sm:$0xff]
          %v415 = vadd.f32 %v414, %v413
          %416 = vst [vmem:[%s231] sm:$0xff] %v415
        $region48: #{tpu_custom_call.1} parent=27 // pred_fallthru
          _
        %s417 = sand.u32 %s106, 1
        %s418 = scalar_lea.sflag [#allocation4], %s417
        %s419 = sand.u32 %s106, 1
        %s420 = smul.addr %s419, 8
        %s421 = scalar_lea.vmem [#allocation7], %s420
        // Predicated region
        $region49: #{tpu_custom_call.1} parent=27 // pred_check
          %p422 = pneg %p116
        $region50: #{tpu_custom_call.1} parent=27 // pred_check_branch
          %424 = sbr.rel (%p422) target = $region52
        $region51: #{tpu_custom_call.1} parent=27 // pred_region
          %426 = vsyncadd %s418, 0
          %s427 = smul.addr %s26, 8
          %s428 = scalar_lea.hbm %s2, %s427
          %s430 = sshll.u32 %s421, 4
          %s431 = int_to_ptr.vmem [resolvable:$true] %s430
          %s432 = sshll.u32 %s428, 4
          %s433 = int_to_ptr.hbm [resolvable:$true] %s432
          %435 = dma.vmem_to_hbm [thread:$0]  %s431, 128, %s433, %s418
        $region52: #{tpu_custom_call.1} parent=27 // pred_fallthru
          _
      $region28: #{tpu_custom_call.1} parent=5 // pred_fallthru
        _
      %p436 = scmp.le.s32.totalorder 2, %s17
      // Predicated region
      $region53: #{tpu_custom_call.1} parent=5 // pred_check
        %p437 = pneg %p436
      $region54: #{tpu_custom_call.1} parent=5 // pred_check_branch
        %439 = sbr.rel (%p437) target = $region56
      $region55: #{tpu_custom_call.1} parent=5 // pred_region
        %s440 = ssub.s32 %s17, 2
        // Predicated region
        $region57: #{tpu_custom_call.1} parent=55 // pred_check
          %p441 = pneg %p122
        $region58: #{tpu_custom_call.1} parent=55 // pred_check_branch
          %443 = sbr.rel (%p441) target = $region60
        $region59: #{tpu_custom_call.1} parent=55 // pred_region
          %s444 = sand.u32 %s107, 1
          %s445 = scalar_lea.sflag [#allocation4], %s444
          %s446 = sand.u32 %s107, 1
          %s447 = smul.addr %s446, 8
          %s448 = scalar_lea.vmem [#allocation7], %s447
          %450 = dma.done %s445, 128
        $region60: #{tpu_custom_call.1} parent=55 // pred_fallthru
          _
      $region56: #{tpu_custom_call.1} parent=5 // pred_fallthru
        _
    $region6: #{tpu_custom_call.1} parent=1 // loop_footer
      %s21 = sadd.s32 1, %s17
    $region7: #{tpu_custom_call.1} parent=1 // loop_footer_branch
      %16 = sbr.rel target = $region3
    $region8: #{tpu_custom_call.1} parent=1 // loop_exit
      _
    %451 = vsyncpa [#allocation3], 1
    %s452 = scalar_lea.sflag [#allocation3], 1
    %453 = vsyncpa %s452, 1
    %454 = vsyncpa [#allocation6], 1
    %s455 = scalar_lea.sflag [#allocation6], 1
    %456 = vsyncpa %s455, 1
    %457 = vsyncpa [#allocation4], 1
    %s458 = scalar_lea.sflag [#allocation4], 1
    %459 = vsyncpa %s458, 1

</llo_original>
